<compile_context>
chip_gen: v7x
topology: tpu7x:2x2x1
jax: 0.10.0
libtpu: 0.0.40
codegen_flags: <defaults>
</compile_context>

<pallas_src>
import functools

import jax
import jax.numpy as jnp
from jax.experimental import pallas as pl
from jax.experimental.pallas import tpu as pltpu

LN_EPS = 1e-5   # torch.nn.LayerNorm default
LANE = 128
SUBLANE = 8
TB_MAX = 256    # batch tile; a few hundred KiB of VMEM per buffer at H=128


def _round_up(x, m):
    return ((x + m - 1) // m) * m


def _masked_layernorm(x, gamma, beta, n_real):
    """LayerNorm over the first n_real lanes of the last dim.

    Padded lanes of `x` are exactly zero (zero-padded weights/biases), so plain
    sums equal the real-lane sums.  Padded lanes of gamma/beta are zero, so the
    padded output lanes stay exactly zero (keeps downstream matmuls exact).
    """
    lane = jax.lax.broadcasted_iota(jnp.int32, x.shape, dimension=x.ndim - 1)
    mask = lane < n_real
    inv_n = 1.0 / n_real
    mean = jnp.sum(x, axis=-1, keepdims=True) * inv_n
    d = jnp.where(mask, x - mean, 0.0)
    var = jnp.sum(d * d, axis=-1, keepdims=True) * inv_n
    inv = jax.lax.rsqrt(var + LN_EPS)          # EUP slot -> effectively free
    return d * inv * gamma + beta


def _dqn_kernel_ln2(state_ref, w1_ref, b1_ref, g1_ref, be1_ref,
                    w2_ref, b2_ref, g2_ref, be2_ref,
                    w3_ref, b3_ref, out_ref, *, n_neuron):
    x = state_ref[...]

    # fc1 -> LayerNorm -> ReLU
    h = jnp.dot(x, w1_ref[...], preferred_element_type=jnp.float32) + b1_ref[...]
    h = jnp.maximum(_masked_layernorm(h, g1_ref[...], be1_ref[...], n_neuron), 0.0)

    # fc2 -> LayerNorm -> ReLU
    h = jnp.dot(h, w2_ref[...], preferred_element_type=jnp.float32) + b2_ref[...]
    h = jnp.maximum(_masked_layernorm(h, g2_ref[...], be2_ref[...], n_neuron), 0.0)

    # fc3 (lane-dense padded output slab -> unmasked vst)
    y = jnp.dot(h, w3_ref[...], preferred_element_type=jnp.float32) + b3_ref[...]
    out_ref[...] = y.astype(out_ref.dtype)


def _dqn_kernel_ln1(state_ref, w1_ref, b1_ref, g1_ref, be1_ref,
                    w3_ref, b3_ref, out_ref, *, n_neuron):
    x = state_ref[...]

    h = jnp.dot(x, w1_ref[...], preferred_element_type=jnp.float32) + b1_ref[...]
    h = jnp.maximum(_masked_layernorm(h, g1_ref[...], be1_ref[...], n_neuron), 0.0)

    y = jnp.dot(h, w3_ref[...], preferred_element_type=jnp.float32) + b3_ref[...]
    out_ref[...] = y.astype(out_ref.dtype)


def init_params(key, input_dims, n_neuron, n_actions, ln):
    """PyTorch-style parameters: fcN_w is (out, in), fcN_b is (out,)."""
    def linear(key, fan_in, fan_out):
        kw, kb = jax.random.split(key)
        bound = 1.0 / jnp.sqrt(fan_in)
        w = jax.random.uniform(kw, (fan_out, fan_in), jnp.float32, -bound, bound)
        b = jax.random.uniform(kb, (fan_out,), jnp.float32, -bound, bound)
        return w, b

    keys = jax.random.split(key, 3)
    params = {}
    params["fc1_w"], params["fc1_b"] = linear(keys[0], input_dims, n_neuron)
    params["fc3_w"], params["fc3_b"] = linear(keys[2], n_neuron, n_actions)
    params["bn1_g"] = jnp.ones((n_neuron,), jnp.float32)
    params["bn1_b"] = jnp.zeros((n_neuron,), jnp.float32)
    if ln != 1:
        params["fc2_w"], params["fc2_b"] = linear(keys[1], n_neuron, n_neuron)
        params["bn2_g"] = jnp.ones((n_neuron,), jnp.float32)
        params["bn2_b"] = jnp.zeros((n_neuron,), jnp.float32)
    return params


def prepare_params(params, input_dims, n_neuron, n_actions, ln):
    """One-time lane padding + (in, out) transpose of PyTorch-layout params.

    Done outside the jitted forward so no transposes/pads are re-done per call.
    Zero padding keeps every matmul exact (padded lanes contribute 0).
    """
    D = _round_up(input_dims, LANE)
    H = _round_up(n_neuron, LANE)
    A = _round_up(n_actions, LANE)

    def lin(w, b, in_pad, out_pad):
        out_dim, in_dim = w.shape
        wt = jnp.zeros((in_pad, out_pad), jnp.float32).at[:in_dim, :out_dim].set(w.T)
        bp = jnp.zeros((1, out_pad), jnp.float32).at[0, :out_dim].set(b)
        return wt, bp

    def vec(v, out_pad):
        return jnp.zeros((1, out_pad), jnp.float32).at[0, : v.shape[0]].set(v)

    p = {}
    p["w1"], p["b1"] = lin(params["fc1_w"], params["fc1_b"], D, H)
    p["g1"], p["be1"] = vec(params["bn1_g"], H), vec(params["bn1_b"], H)
    if ln != 1:
        p["w2"], p["b2"] = lin(params["fc2_w"], params["fc2_b"], H, H)
        p["g2"], p["be2"] = vec(params["bn2_g"], H), vec(params["bn2_b"], H)
    p["w3"], p["b3"] = lin(params["fc3_w"], params["fc3_b"], H, A)
    return p


@functools.partial(jax.jit, static_argnames=("n_neuron", "n_actions", "ln"))
def dqn_forward(state, prepared, n_neuron, n_actions, ln=2):
    """Fused DeepQNetwork forward pass (single Pallas TPU kernel)."""
    B, D_in = state.shape
    D_pad = prepared["w1"].shape[0]
    H_pad = prepared["w1"].shape[1]
    A_pad = prepared["w3"].shape[1]

    # Batch tiling: TB rows per grid step, B padded so the grid divides evenly.
    B8 = _round_up(B, SUBLANE)
    TB = min(TB_MAX, B8)
    B_pad = _round_up(B8, TB)
    x = state.astype(jnp.float32)
    if B_pad != B or D_pad != D_in:
        x = jnp.pad(x, ((0, B_pad - B), (0, D_pad - D_in)))

    if ln == 1:
        kernel = functools.partial(_dqn_kernel_ln1, n_neuron=n_neuron)
        weight_args = (prepared["w1"], prepared["b1"], prepared["g1"], prepared["be1"],
                       prepared["w3"], prepared["b3"])
    else:
        kernel = functools.partial(_dqn_kernel_ln2, n_neuron=n_neuron)
        weight_args = (prepared["w1"], prepared["b1"], prepared["g1"], prepared["be1"],
                       prepared["w2"], prepared["b2"], prepared["g2"], prepared["be2"],
                       prepared["w3"], prepared["b3"])

    grid = (B_pad // TB,)
    state_spec = pl.BlockSpec((TB, D_pad), lambda i: (i, 0))
    # Weights/biases: whole-array blocks with constant index maps -> VMEM-resident
    # across all grid iterations (Pallas re-uses the buffer, no re-fetch).
    weight_specs = [pl.BlockSpec(a.shape, lambda i: (0, 0)) for a in weight_args]
    out_spec = pl.BlockSpec((TB, A_pad), lambda i: (i, 0))  # lane-dense output slab

    flops = 2 * B_pad * (D_pad * H_pad
                         + (H_pad * H_pad if ln != 1 else 0)
                         + H_pad * A_pad)
    transcendentals = B_pad * (1 if ln == 1 else 2)          # one rsqrt per row per LN
    bytes_accessed = 4 * (B_pad * D_pad
                          + sum(int(a.size) for a in weight_args)
                          + B_pad * A_pad)

    out = pl.pallas_call(
        kernel,
        out_shape=jax.ShapeDtypeStruct((B_pad, A_pad), jnp.float32),
        grid=grid,
        in_specs=[state_spec] + weight_specs,
        out_specs=out_spec,
        compiler_params=pltpu.CompilerParams(
            dimension_semantics=("parallel",),      # 2-TC sharding on v7x
            vmem_limit_bytes=32 * 1024 * 1024,      # safe on v5e/v6e/v7x
        ),
        cost_estimate=pl.CostEstimate(
            flops=flops,
            transcendentals=transcendentals,
            bytes_accessed=bytes_accessed,
        ),
    )(x, *weight_args)

    return out[:B, :n_actions]


def dqn_forward_ref(state, params, ln=2):
    """Pure-JAX reference matching the PyTorch forward."""
    def layernorm(x, g, b):
        mean = jnp.mean(x, axis=-1, keepdims=True)
        var = jnp.mean((x - mean) ** 2, axis=-1, keepdims=True)
        return (x - mean) / jnp.sqrt(var + LN_EPS) * g + b

    x = state @ params["fc1_w"].T + params["fc1_b"]
    x = jnp.maximum(layernorm(x, params["bn1_g"], params["bn1_b"]), 0.0)
    if ln != 1:
        x = x @ params["fc2_w"].T + params["fc2_b"]
        x = jnp.maximum(layernorm(x, params["bn2_g"], params["bn2_b"]), 0.0)
    x = x @ params["fc3_w"].T + params["fc3_b"]
    return x


if __name__ == "__main__":
    key = jax.random.PRNGKey(0)
    k_state, k_params = jax.random.split(key)

    B = 8
    input_dims = 16
    n_neuron = 32
    n_actions = 4

    state = jax.random.normal(k_state, (B, input_dims), jnp.float32)

    # ln != 1 variant (fc1 -> LN -> ReLU -> fc2 -> LN -> ReLU -> fc3)
    params2 = init_params(k_params, input_dims, n_neuron, n_actions, ln=2)
    prep2 = prepare_params(params2, input_dims, n_neuron, n_actions, ln=2)
    out2 = dqn_forward(state, prep2, n_neuron=n_neuron, n_actions=n_actions, ln=2)
    jax.block_until_ready(out2)
    ref2 = dqn_forward_ref(state, params2, ln=2)
    assert out2.shape == (B, n_actions)
    assert jnp.allclose(out2, ref2, atol=1e-4, rtol=1e-4)

    # ln == 1 variant (fc1 -> LN -> ReLU -> fc3)
    params1 = init_params(k_params, input_dims, n_neuron, n_actions, ln=1)
    prep1 = prepare_params(params1, input_dims, n_neuron, n_actions, ln=1)
    out1 = dqn_forward(state, prep1, n_neuron=n_neuron, n_actions=n_actions, ln=1)
    jax.block_until_ready(out1)
    assert jnp.allclose(out1, dqn_forward_ref(state, params1, ln=1), atol=1e-4, rtol=1e-4)

    # Odd batch size (exercises sublane padding + output slicing).
    state5 = jax.random.normal(jax.random.PRNGKey(1), (5, input_dims), jnp.float32)
    out5 = dqn_forward(state5, prep2, n_neuron=n_neuron, n_actions=n_actions, ln=2)
    jax.block_until_ready(out5)
    assert out5.shape == (5, n_actions)
    assert jnp.allclose(out5, dqn_forward_ref(state5, params2, ln=2), atol=1e-4, rtol=1e-4)

    print("KERNEL_OK")
</pallas_src>

<mosaic_0001>
module attributes {stable_mosaic.version = 11 : i64} {
  func.func @_dqn_kernel_ln2(%arg0: i32, %arg1: memref<8x128xf32, #tpu.memory_space<vmem>>, %arg2: memref<128x128xf32, #tpu.memory_space<vmem>>, %arg3: memref<1x128xf32, #tpu.memory_space<vmem>>, %arg4: memref<1x128xf32, #tpu.memory_space<vmem>>, %arg5: memref<1x128xf32, #tpu.memory_space<vmem>>, %arg6: memref<128x128xf32, #tpu.memory_space<vmem>>, %arg7: memref<1x128xf32, #tpu.memory_space<vmem>>, %arg8: memref<1x128xf32, #tpu.memory_space<vmem>>, %arg9: memref<1x128xf32, #tpu.memory_space<vmem>>, %arg10: memref<128x128xf32, #tpu.memory_space<vmem>>, %arg11: memref<1x128xf32, #tpu.memory_space<vmem>>, %arg12: memref<8x128xf32, #tpu.memory_space<vmem>>) attributes {dimension_semantics = [#tpu.dimension_semantics<parallel>], iteration_bounds = array<i64: 1>, scalar_prefetch = 0 : i64, scratch_operands = 0 : i64, tpu.core_type = #tpu.core_type<tc>, window_params = [{transform_indices = @transform_0, window_bounds = array<i64: 8, 128>}, {pipeline_mode = #tpu.pipeline_mode<synchronous>, transform_indices = @transform_1, window_bounds = array<i64: 128, 128>}, {pipeline_mode = #tpu.pipeline_mode<synchronous>, transform_indices = @transform_2, window_bounds = array<i64: 1, 128>}, {pipeline_mode = #tpu.pipeline_mode<synchronous>, transform_indices = @transform_3, window_bounds = array<i64: 1, 128>}, {pipeline_mode = #tpu.pipeline_mode<synchronous>, transform_indices = @transform_4, window_bounds = array<i64: 1, 128>}, {pipeline_mode = #tpu.pipeline_mode<synchronous>, transform_indices = @transform_5, window_bounds = array<i64: 128, 128>}, {pipeline_mode = #tpu.pipeline_mode<synchronous>, transform_indices = @transform_6, window_bounds = array<i64: 1, 128>}, {pipeline_mode = #tpu.pipeline_mode<synchronous>, transform_indices = @transform_7, window_bounds = array<i64: 1, 128>}, {pipeline_mode = #tpu.pipeline_mode<synchronous>, transform_indices = @transform_8, window_bounds = array<i64: 1, 128>}, {pipeline_mode = #tpu.pipeline_mode<synchronous>, transform_indices = @transform_9, window_bounds = array<i64: 128, 128>}, {pipeline_mode = #tpu.pipeline_mode<synchronous>, transform_indices = @transform_10, window_bounds = array<i64: 1, 128>}, {transform_indices = @transform_11, window_bounds = array<i64: 8, 128>}]} {
    %c0 = arith.constant 0 : index
    %c0_0 = arith.constant 0 : index
    %0 = vector.load %arg1[%c0, %c0_0] : memref<8x128xf32, #tpu.memory_space<vmem>>, vector<8x128xf32>
    %c0_1 = arith.constant 0 : index
    %c0_2 = arith.constant 0 : index
    %1 = vector.load %arg2[%c0_1, %c0_2] : memref<128x128xf32, #tpu.memory_space<vmem>>, vector<128x128xf32>
    %cst = arith.constant dense<0.000000e+00> : vector<8x128xf32>
    %2 = tpu.matmul %0, %1, %cst {dimension_numbers = #tpu.dot_dimension_numbers<[1], [0], [0], [1], [0, 0, 1, 1], [], []>} : vector<8x128xf32>, vector<128x128xf32>, vector<8x128xf32> -> vector<8x128xf32>
    %c0_3 = arith.constant 0 : index
    %c0_4 = arith.constant 0 : index
    %3 = vector.load %arg3[%c0_3, %c0_4] : memref<1x128xf32, #tpu.memory_space<vmem>>, vector<1x128xf32>
    %4 = vector.broadcast %3 : vector<1x128xf32> to vector<8x128xf32>
    %5 = arith.addf %2, %4 : vector<8x128xf32>
    %c0_5 = arith.constant 0 : index
    %c0_6 = arith.constant 0 : index
    %6 = vector.load %arg4[%c0_5, %c0_6] : memref<1x128xf32, #tpu.memory_space<vmem>>, vector<1x128xf32>
    %c0_7 = arith.constant 0 : index
    %c0_8 = arith.constant 0 : index
    %7 = vector.load %arg5[%c0_7, %c0_8] : memref<1x128xf32, #tpu.memory_space<vmem>>, vector<1x128xf32>
    %8 = tpu.iota {dimensions = array<i32: 1>} : vector<8x128xi32>
    %c32_i32 = arith.constant 32 : i32
    %9 = vector.broadcast %c32_i32 : i32 to vector<8x128xi32>
    %10 = arith.cmpi slt, %8, %9 : vector<8x128xi32>
    %cst_9 = arith.constant dense<0.000000e+00> : vector<8xf32>
    %11 = vector.multi_reduction <add>, %5, %cst_9 [1] : vector<8x128xf32> to vector<8xf32>
    %12 = vector.shape_cast %11 : vector<8xf32> to vector<8x1xf32>
    %cst_10 = arith.constant 3.125000e-02 : f32
    %13 = vector.broadcast %cst_10 : f32 to vector<8x1xf32>
    %14 = arith.mulf %12, %13 : vector<8x1xf32>
    %15 = vector.broadcast %14 : vector<8x1xf32> to vector<8x128xf32>
    %16 = arith.subf %5, %15 : vector<8x128xf32>
    %cst_11 = arith.constant 0.000000e+00 : f32
    %17 = vector.broadcast %cst_11 : f32 to vector<8x128xf32>
    %18 = arith.select %10, %16, %17 : vector<8x128xi1>, vector<8x128xf32>
    %19 = arith.mulf %18, %18 : vector<8x128xf32>
    %cst_12 = arith.constant dense<0.000000e+00> : vector<8xf32>
    %20 = vector.multi_reduction <add>, %19, %cst_12 [1] : vector<8x128xf32> to vector<8xf32>
    %21 = vector.shape_cast %20 : vector<8xf32> to vector<8x1xf32>
    %cst_13 = arith.constant 3.125000e-02 : f32
    %22 = vector.broadcast %cst_13 : f32 to vector<8x1xf32>
    %23 = arith.mulf %21, %22 : vector<8x1xf32>
    %cst_14 = arith.constant 9.99999974E-6 : f32
    %24 = vector.broadcast %cst_14 : f32 to vector<8x1xf32>
    %25 = arith.addf %23, %24 : vector<8x1xf32>
    %26 = math.rsqrt %25 : vector<8x1xf32>
    %27 = vector.broadcast %26 : vector<8x1xf32> to vector<8x128xf32>
    %28 = arith.mulf %18, %27 : vector<8x128xf32>
    %29 = vector.broadcast %6 : vector<1x128xf32> to vector<8x128xf32>
    %30 = arith.mulf %28, %29 : vector<8x128xf32>
    %31 = vector.broadcast %7 : vector<1x128xf32> to vector<8x128xf32>
    %32 = arith.addf %30, %31 : vector<8x128xf32>
    %cst_15 = arith.constant 0.000000e+00 : f32
    %33 = vector.broadcast %cst_15 : f32 to vector<8x128xf32>
    %34 = arith.maximumf %32, %33 : vector<8x128xf32>
    %c0_16 = arith.constant 0 : index
    %c0_17 = arith.constant 0 : index
    %35 = vector.load %arg6[%c0_16, %c0_17] : memref<128x128xf32, #tpu.memory_space<vmem>>, vector<128x128xf32>
    %cst_18 = arith.constant dense<0.000000e+00> : vector<8x128xf32>
    %36 = tpu.matmul %34, %35, %cst_18 {dimension_numbers = #tpu.dot_dimension_numbers<[1], [0], [0], [1], [0, 0, 1, 1], [], []>} : vector<8x128xf32>, vector<128x128xf32>, vector<8x128xf32> -> vector<8x128xf32>
    %c0_19 = arith.constant 0 : index
    %c0_20 = arith.constant 0 : index
    %37 = vector.load %arg7[%c0_19, %c0_20] : memref<1x128xf32, #tpu.memory_space<vmem>>, vector<1x128xf32>
    %38 = vector.broadcast %37 : vector<1x128xf32> to vector<8x128xf32>
    %39 = arith.addf %36, %38 : vector<8x128xf32>
    %c0_21 = arith.constant 0 : index
    %c0_22 = arith.constant 0 : index
    %40 = vector.load %arg8[%c0_21, %c0_22] : memref<1x128xf32, #tpu.memory_space<vmem>>, vector<1x128xf32>
    %c0_23 = arith.constant 0 : index
    %c0_24 = arith.constant 0 : index
    %41 = vector.load %arg9[%c0_23, %c0_24] : memref<1x128xf32, #tpu.memory_space<vmem>>, vector<1x128xf32>
    %42 = tpu.iota {dimensions = array<i32: 1>} : vector<8x128xi32>
    %c32_i32_25 = arith.constant 32 : i32
    %43 = vector.broadcast %c32_i32_25 : i32 to vector<8x128xi32>
    %44 = arith.cmpi slt, %42, %43 : vector<8x128xi32>
    %cst_26 = arith.constant dense<0.000000e+00> : vector<8xf32>
    %45 = vector.multi_reduction <add>, %39, %cst_26 [1] : vector<8x128xf32> to vector<8xf32>
    %46 = vector.shape_cast %45 : vector<8xf32> to vector<8x1xf32>
    %cst_27 = arith.constant 3.125000e-02 : f32
    %47 = vector.broadcast %cst_27 : f32 to vector<8x1xf32>
    %48 = arith.mulf %46, %47 : vector<8x1xf32>
    %49 = vector.broadcast %48 : vector<8x1xf32> to vector<8x128xf32>
    %50 = arith.subf %39, %49 : vector<8x128xf32>
    %cst_28 = arith.constant 0.000000e+00 : f32
    %51 = vector.broadcast %cst_28 : f32 to vector<8x128xf32>
    %52 = arith.select %44, %50, %51 : vector<8x128xi1>, vector<8x128xf32>
    %53 = arith.mulf %52, %52 : vector<8x128xf32>
    %cst_29 = arith.constant dense<0.000000e+00> : vector<8xf32>
    %54 = vector.multi_reduction <add>, %53, %cst_29 [1] : vector<8x128xf32> to vector<8xf32>
    %55 = vector.shape_cast %54 : vector<8xf32> to vector<8x1xf32>
    %cst_30 = arith.constant 3.125000e-02 : f32
    %56 = vector.broadcast %cst_30 : f32 to vector<8x1xf32>
    %57 = arith.mulf %55, %56 : vector<8x1xf32>
    %cst_31 = arith.constant 9.99999974E-6 : f32
    %58 = vector.broadcast %cst_31 : f32 to vector<8x1xf32>
    %59 = arith.addf %57, %58 : vector<8x1xf32>
    %60 = math.rsqrt %59 : vector<8x1xf32>
    %61 = vector.broadcast %60 : vector<8x1xf32> to vector<8x128xf32>
    %62 = arith.mulf %52, %61 : vector<8x128xf32>
    %63 = vector.broadcast %40 : vector<1x128xf32> to vector<8x128xf32>
    %64 = arith.mulf %62, %63 : vector<8x128xf32>
    %65 = vector.broadcast %41 : vector<1x128xf32> to vector<8x128xf32>
    %66 = arith.addf %64, %65 : vector<8x128xf32>
    %cst_32 = arith.constant 0.000000e+00 : f32
    %67 = vector.broadcast %cst_32 : f32 to vector<8x128xf32>
    %68 = arith.maximumf %66, %67 : vector<8x128xf32>
    %c0_33 = arith.constant 0 : index
    %c0_34 = arith.constant 0 : index
    %69 = vector.load %arg10[%c0_33, %c0_34] : memref<128x128xf32, #tpu.memory_space<vmem>>, vector<128x128xf32>
    %cst_35 = arith.constant dense<0.000000e+00> : vector<8x128xf32>
    %70 = tpu.matmul %68, %69, %cst_35 {dimension_numbers = #tpu.dot_dimension_numbers<[1], [0], [0], [1], [0, 0, 1, 1], [], []>} : vector<8x128xf32>, vector<128x128xf32>, vector<8x128xf32> -> vector<8x128xf32>
    %c0_36 = arith.constant 0 : index
    %c0_37 = arith.constant 0 : index
    %71 = vector.load %arg11[%c0_36, %c0_37] : memref<1x128xf32, #tpu.memory_space<vmem>>, vector<1x128xf32>
    %72 = vector.broadcast %71 : vector<1x128xf32> to vector<8x128xf32>
    %73 = arith.addf %70, %72 : vector<8x128xf32>
    %c0_38 = arith.constant 0 : index
    %c0_39 = arith.constant 0 : index
    %74 = vector.load %arg12[%c0_38, %c0_39] : memref<8x128xf32, #tpu.memory_space<vmem>>, vector<8x128xf32>
    tpu.vector_store %arg12[%c0_38, %c0_39], %73 {strides = array<i32>} : memref<8x128xf32, #tpu.memory_space<vmem>>, vector<8x128xf32>,
    return
  }
  func.func @transform_0(%arg0: i32) -> (i32, i32) {
    %c0_i32 = arith.constant 0 : i32
    %c0_i32_0 = arith.constant 0 : i32
    return %arg0, %c0_i32 : i32, i32
  }
  func.func @transform_1(%arg0: i32) -> (i32, i32) {
    %c0_i32 = arith.constant 0 : i32
    %c0_i32_0 = arith.constant 0 : i32
    %c0_i32_1 = arith.constant 0 : i32
    return %c0_i32, %c0_i32_0 : i32, i32
  }
  func.func @transform_2(%arg0: i32) -> (i32, i32) {
    %c0_i32 = arith.constant 0 : i32
    %c0_i32_0 = arith.constant 0 : i32
    %c0_i32_1 = arith.constant 0 : i32
    return %c0_i32, %c0_i32_0 : i32, i32
  }
  func.func @transform_3(%arg0: i32) -> (i32, i32) {
    %c0_i32 = arith.constant 0 : i32
    %c0_i32_0 = arith.constant 0 : i32
    %c0_i32_1 = arith.constant 0 : i32
    return %c0_i32, %c0_i32_0 : i32, i32
  }
  func.func @transform_4(%arg0: i32) -> (i32, i32) {
    %c0_i32 = arith.constant 0 : i32
    %c0_i32_0 = arith.constant 0 : i32
    %c0_i32_1 = arith.constant 0 : i32
    return %c0_i32, %c0_i32_0 : i32, i32
  }
  func.func @transform_5(%arg0: i32) -> (i32, i32) {
    %c0_i32 = arith.constant 0 : i32
    %c0_i32_0 = arith.constant 0 : i32
    %c0_i32_1 = arith.constant 0 : i32
    return %c0_i32, %c0_i32_0 : i32, i32
  }
  func.func @transform_6(%arg0: i32) -> (i32, i32) {
    %c0_i32 = arith.constant 0 : i32
    %c0_i32_0 = arith.constant 0 : i32
    %c0_i32_1 = arith.constant 0 : i32
    return %c0_i32, %c0_i32_0 : i32, i32
  }
  func.func @transform_7(%arg0: i32) -> (i32, i32) {
    %c0_i32 = arith.constant 0 : i32
    %c0_i32_0 = arith.constant 0 : i32
    %c0_i32_1 = arith.constant 0 : i32
    return %c0_i32, %c0_i32_0 : i32, i32
  }
  func.func @transform_8(%arg0: i32) -> (i32, i32) {
    %c0_i32 = arith.constant 0 : i32
    %c0_i32_0 = arith.constant 0 : i32
    %c0_i32_1 = arith.constant 0 : i32
    return %c0_i32, %c0_i32_0 : i32, i32
  }
  func.func @transform_9(%arg0: i32) -> (i32, i32) {
    %c0_i32 = arith.constant 0 : i32
    %c0_i32_0 = arith.constant 0 : i32
    %c0_i32_1 = arith.constant 0 : i32
    return %c0_i32, %c0_i32_0 : i32, i32
  }
  func.func @transform_10(%arg0: i32) -> (i32, i32) {
    %c0_i32 = arith.constant 0 : i32
    %c0_i32_0 = arith.constant 0 : i32
    %c0_i32_1 = arith.constant 0 : i32
    return %c0_i32, %c0_i32_0 : i32, i32
  }
  func.func @transform_11(%arg0: i32) -> (i32, i32) {
    %c0_i32 = arith.constant 0 : i32
    %c0_i32_0 = arith.constant 0 : i32
    return %arg0, %c0_i32 : i32, i32
  }
}

</mosaic_0001>

<llo_original>
// kernel: dqn_forward.1
$region0: #{dqn_forward.1}
  #allocation0 [shape = 'u32[]', space=smem, size = 0x4, offset = 0x4, fixed_abs, tag = 'smem constant byte address 0x4 - core index']
  #allocation1 [shape = 'u32[144,128]{1,0:T(1,128)}', space=vmem, size = 0x12000, scoped, tag = 'internal scratch']
  %s0 = inlined_call_operand.vmem [shape: f32[8,128], index: 0, kind: input, shape index: {}]
  %s1 = inlined_call_operand.hbm [shape: f32[128,128], index: 1, kind: input, shape index: {}]
  %s2 = inlined_call_operand.vmem [shape: f32[1,128], index: 2, kind: input, shape index: {}]
  %s3 = inlined_call_operand.vmem [shape: f32[1,128], index: 3, kind: input, shape index: {}]
  %s4 = inlined_call_operand.vmem [shape: f32[1,128], index: 4, kind: input, shape index: {}]
  %s5 = inlined_call_operand.hbm [shape: f32[128,128], index: 5, kind: input, shape index: {}]
  %s6 = inlined_call_operand.vmem [shape: f32[1,128], index: 6, kind: input, shape index: {}]
  %s7 = inlined_call_operand.vmem [shape: f32[1,128], index: 7, kind: input, shape index: {}]
  %s8 = inlined_call_operand.vmem [shape: f32[1,128], index: 8, kind: input, shape index: {}]
  %s9 = inlined_call_operand.hbm [shape: f32[128,128], index: 9, kind: input, shape index: {}]
  %s10 = inlined_call_operand.vmem [shape: f32[1,128], index: 10, kind: input, shape index: {}]
  %s11 = inlined_call_operand.vmem [shape: f32[8,128], index: 11, kind: output, shape index: {}]
  %s12 = sld [smem:[#allocation0]]
  $region66: #{dqn_forward.1} parent=0
    _
  %s14 = ssub.s32 1, %s12
  %s15 = scalar_select 0, %s14, %s12
  $region1: #{dqn_forward.1} parent=0
    #allocation2 [shape = 'u8[65536]{0}', space=vmem, size = 0x10000, scoped, tag = 'input window, operand 1, single buffered']
    #allocation3 [shape = 's32[1]{0}', space=sflag, size = 0x4, scoped, tag = 'scoped memory for dqn_forward.1']
    #allocation4 [shape = 'u8[65536]{0}', space=vmem, size = 0x10000, scoped, tag = 'input window, operand 5, single buffered']
    #allocation5 [shape = 's32[1]{0}', space=sflag, size = 0x4, scoped, tag = 'scoped memory for dqn_forward.1']
    #allocation6 [shape = 'u8[65536]{0}', space=vmem, size = 0x10000, scoped, tag = 'input window, operand 9, single buffered']
    %16 = vsyncpa [#allocation3], 0
    %17 = vsyncpa [#allocation5], 0
    // Predicated region
    $region2: #{dqn_forward.1} parent=1 // pred_check
      _
    $region3: #{dqn_forward.1} parent=1 // pred_check_branch
      %19 = sbr.rel (0) target = $region5
    $region4: #{dqn_forward.1} parent=1 // pred_region
      _
    $region5: #{dqn_forward.1} parent=1 // pred_fallthru
      _
    // Predicated region
    $region6: #{dqn_forward.1} parent=1 // pred_check
      _
    $region7: #{dqn_forward.1} parent=1 // pred_check_branch
      %21 = sbr.rel (0) target = $region9
    $region8: #{dqn_forward.1} parent=1 // pred_region
      %s23 = ssub.s32 2048, 2048
      %24 = vsyncadd [#allocation3], %s23
      %s25 = sshll.u32 [#allocation2], 4
      %s26 = int_to_ptr.vmem [resolvable:$true] %s25
      %31 = dma.hbm_to_vmem [thread:$0]  %s1, 2048, %s26, [#allocation3], 128, 128, 8
    $region9: #{dqn_forward.1} parent=1 // pred_fallthru
      _
    // Predicated region
    $region10: #{dqn_forward.1} parent=1 // pred_check
      _
    $region11: #{dqn_forward.1} parent=1 // pred_check_branch
      %33 = sbr.rel (0) target = $region13
    $region12: #{dqn_forward.1} parent=1 // pred_region
      _
    $region13: #{dqn_forward.1} parent=1 // pred_fallthru
      _
    // Predicated region
    $region14: #{dqn_forward.1} parent=1 // pred_check
      _
    $region15: #{dqn_forward.1} parent=1 // pred_check_branch
      %35 = sbr.rel (0) target = $region17
    $region16: #{dqn_forward.1} parent=1 // pred_region
      _
    $region17: #{dqn_forward.1} parent=1 // pred_fallthru
      _
    // Predicated region
    $region18: #{dqn_forward.1} parent=1 // pred_check
      _
    $region19: #{dqn_forward.1} parent=1 // pred_check_branch
      %37 = sbr.rel (0) target = $region21
    $region20: #{dqn_forward.1} parent=1 // pred_region
      _
    $region21: #{dqn_forward.1} parent=1 // pred_fallthru
      _
    // Predicated region
    $region22: #{dqn_forward.1} parent=1 // pred_check
      _
    $region23: #{dqn_forward.1} parent=1 // pred_check_branch
      %39 = sbr.rel (0) target = $region25
    $region24: #{dqn_forward.1} parent=1 // pred_region
      %s41 = ssub.s32 2048, 2048
      %42 = vsyncadd [#allocation5], %s41
      %s43 = sshll.u32 [#allocation4], 4
      %s44 = int_to_ptr.vmem [resolvable:$true] %s43
      %49 = dma.hbm_to_vmem [thread:$0]  %s5, 2048, %s44, [#allocation5], 128, 128, 8
    $region25: #{dqn_forward.1} parent=1 // pred_fallthru
      _
    // Predicated region
    $region26: #{dqn_forward.1} parent=1 // pred_check
      _
    $region27: #{dqn_forward.1} parent=1 // pred_check_branch
      %51 = sbr.rel (0) target = $region29
    $region28: #{dqn_forward.1} parent=1 // pred_region
      _
    $region29: #{dqn_forward.1} parent=1 // pred_fallthru
      _
    // Predicated region
    $region30: #{dqn_forward.1} parent=1 // pred_check
      _
    $region31: #{dqn_forward.1} parent=1 // pred_check_branch
      %53 = sbr.rel (0) target = $region33
    $region32: #{dqn_forward.1} parent=1 // pred_region
      _
    $region33: #{dqn_forward.1} parent=1 // pred_fallthru
      _
    // Predicated region
    $region34: #{dqn_forward.1} parent=1 // pred_check
      _
    $region35: #{dqn_forward.1} parent=1 // pred_check_branch
      %55 = sbr.rel (0) target = $region37
    $region36: #{dqn_forward.1} parent=1 // pred_region
      _
    $region37: #{dqn_forward.1} parent=1 // pred_fallthru
      _
    // Predicated region
    $region38: #{dqn_forward.1} parent=1 // pred_check
      _
    $region39: #{dqn_forward.1} parent=1 // pred_check_branch
      %57 = sbr.rel (0) target = $region41
    $region40: #{dqn_forward.1} parent=1 // pred_region
      %s59 = ssub.s32 2048, 2048
      %60 = vsyncadd [#allocation5], %s59
      %s61 = sshll.u32 [#allocation6], 4
      %s62 = int_to_ptr.vmem [resolvable:$true] %s61
      %67 = dma.hbm_to_vmem [thread:$0]  %s9, 2048, %s62, [#allocation5], 128, 128, 8
    $region41: #{dqn_forward.1} parent=1 // pred_fallthru
      _
    // Predicated region
    $region42: #{dqn_forward.1} parent=1 // pred_check
      _
    $region43: #{dqn_forward.1} parent=1 // pred_check_branch
      %69 = sbr.rel (0) target = $region45
    $region44: #{dqn_forward.1} parent=1 // pred_region
      _
    $region45: #{dqn_forward.1} parent=1 // pred_fallthru
      _
    // Predicated region
    $region46: #{dqn_forward.1} parent=1 // pred_check
      _
    $region47: #{dqn_forward.1} parent=1 // pred_check_branch
      %71 = sbr.rel (0) target = $region49
    $region48: #{dqn_forward.1} parent=1 // pred_region
      %72 = dma.done [#allocation3], 2048
    $region49: #{dqn_forward.1} parent=1 // pred_fallthru
      _
    // Predicated region
    $region50: #{dqn_forward.1} parent=1 // pred_check
      _
    $region51: #{dqn_forward.1} parent=1 // pred_check_branch
      %74 = sbr.rel (0) target = $region53
    $region52: #{dqn_forward.1} parent=1 // pred_region
      %75 = dma.done [#allocation5], 2048
    $region53: #{dqn_forward.1} parent=1 // pred_fallthru
      _
    // Predicated region
    $region54: #{dqn_forward.1} parent=1 // pred_check
      _
    $region55: #{dqn_forward.1} parent=1 // pred_check_branch
      %77 = sbr.rel (0) target = $region57
    $region56: #{dqn_forward.1} parent=1 // pred_region
      %78 = dma.done [#allocation5], 2048
    $region57: #{dqn_forward.1} parent=1 // pred_fallthru
      _
    %v79 = vld [vmem:[%s0] sm:$0xff]
    %v80 = vld [vmem:[#allocation2] sm:$0xff]
    %v81 = vld [vmem:[#allocation2 + $0x8] sm:$0xff]
    %v82 = vld [vmem:[#allocation2 + $0x10] sm:$0xff]
    %v83 = vld [vmem:[#allocation2 + $0x18] sm:$0xff]
    %v84 = vld [vmem:[#allocation2 + $0x20] sm:$0xff]
    %v85 = vld [vmem:[#allocation2 + $0x28] sm:$0xff]
    %v86 = vld [vmem:[#allocation2 + $0x30] sm:$0xff]
    %v87 = vld [vmem:[#allocation2 + $0x38] sm:$0xff]
    %v88 = vld [vmem:[#allocation2 + $0x40] sm:$0xff]
    %v89 = vld [vmem:[#allocation2 + $0x48] sm:$0xff]
    %v90 = vld [vmem:[#allocation2 + $0x50] sm:$0xff]
    %v91 = vld [vmem:[#allocation2 + $0x58] sm:$0xff]
    %v92 = vld [vmem:[#allocation2 + $0x60] sm:$0xff]
    %v93 = vld [vmem:[#allocation2 + $0x68] sm:$0xff]
    %v94 = vld [vmem:[#allocation2 + $0x70] sm:$0xff]
    %v95 = vld [vmem:[#allocation2 + $0x78] sm:$0xff]
    %v96 = vld [vmem:[%s2] sm:$0x1]
    %v98 = vlaneseq
    %v99 = vshrl.u32 %v98, 7
    %v100 = vsub.s32 0, %v99
    %v101 = vrot.slane %v96, %v100
    %103 = vmatprep.subr.mxu0 0.0
    %104 = vmatpush1.msra.mxu0 %v80
    %105 = vmatprep.subr.mxu0 0.0
    %106 = vmatpush1.msra.mxu0 %v81
    %107 = vmatprep.subr.mxu0 0.0
    %108 = vmatpush1.msra.mxu0 %v82
    %109 = vmatprep.subr.mxu0 0.0
    %110 = vmatpush1.msra.mxu0 %v83
    %111 = vmatprep.subr.mxu0 0.0
    %112 = vmatpush1.msra.mxu0 %v84
    %113 = vmatprep.subr.mxu0 0.0
    %114 = vmatpush1.msra.mxu0 %v85
    %115 = vmatprep.subr.mxu0 0.0
    %116 = vmatpush1.msra.mxu0 %v86
    %117 = vmatprep.subr.mxu0 0.0
    %118 = vmatpush1.msra.mxu0 %v87
    %119 = vmatprep.subr.mxu0 0.0
    %120 = vmatpush1.msra.mxu0 %v88
    %121 = vmatprep.subr.mxu0 0.0
    %122 = vmatpush1.msra.mxu0 %v89
    %123 = vmatprep.subr.mxu0 0.0
    %124 = vmatpush1.msra.mxu0 %v90
    %125 = vmatprep.subr.mxu0 0.0
    %126 = vmatpush1.msra.mxu0 %v91
    %127 = vmatprep.subr.mxu0 0.0
    %128 = vmatpush1.msra.mxu0 %v92
    %129 = vmatprep.subr.mxu0 0.0
    %130 = vmatpush1.msra.mxu0 %v93
    %131 = vmatprep.subr.mxu0 0.0
    %132 = vmatpush1.msra.mxu0 %v94
    %133 = vmatprep.subr.mxu0 0.0
    %134 = vmatpush1.msra.mxu0 %v95
    %135 = vmatprep.subr.mxu0 0.0
    %136 = vmatpush1.msra.mxu0 0.0
    %137 = vmatprep.subr.mxu0 0.0
    %138 = vmatpush1.msra.mxu0 0.0
    %139 = vmatprep.subr.mxu0 0.0
    %140 = vmatpush1.msra.mxu0 0.0
    %141 = vmatprep.subr.mxu0 0.0
    %142 = vmatpush1.msra.mxu0 0.0
    %143 = vmatprep.subr.mxu0 0.0
    %144 = vmatpush1.msra.mxu0 0.0
    %145 = vmatprep.subr.mxu0 0.0
    %146 = vmatpush1.msra.mxu0 0.0
    %147 = vmatprep.subr.mxu0 0.0
    %148 = vmatpush1.msra.mxu0 0.0
    %149 = vmatprep.subr.mxu0 0.0
    %150 = vmatpush1.msra.mxu0 0.0
    %151 = vmatprep.subr.mxu0 0.0
    %152 = vmatpush1.msra.mxu0 0.0
    %153 = vmatprep.subr.mxu0 0.0
    %154 = vmatpush1.msra.mxu0 0.0
    %155 = vmatprep.subr.mxu0 0.0
    %156 = vmatpush1.msra.mxu0 0.0
    %157 = vmatprep.subr.mxu0 0.0
    %158 = vmatpush1.msra.mxu0 0.0
    %159 = vmatprep.subr.mxu0 0.0
    %160 = vmatpush1.msra.mxu0 0.0
    %161 = vmatprep.subr.mxu0 0.0
    %162 = vmatpush1.msra.mxu0 0.0
    %163 = vmatprep.subr.mxu0 0.0
    %164 = vmatpush1.msra.mxu0 0.0
    %165 = vmatprep.subr.mxu0 0.0
    %166 = vmatpush1.msra.mxu0 0.0
    %167 = vmatprep.mubr.f32.mxu0 0.0
    %168 = vmatmul.mubr.f32.gmra.mrb[0].mxu0 %v79
    %v169 = vpop.f32.mrb[0].mxu0
    %v170 = vadd.f32 %v101, %v169
    %v171 = vpop.f32.mrb[0].mxu0
    %172 = vdwg.mxu0
    %v173 = vld [vmem:[%s3] sm:$0x1]
    %v174 = vld [vmem:[%s4] sm:$0x1]
    %v175 = vlaneseq
    %v176 = vand.u32 %v175, 127
    %vm177 = vcmp.lt.s32.totalorder %v176, 32
    %178 = vadd.xlane.f32.xlu0 %v170
    %v179 = vpop.xlane.xlu0 %178
    %v180 = vmul.f32 %v179, 0.03125
    %v181 = vsub.f32 %v170, %v180
    %v182 = vsel %vm177, %v181, 0.0
    %v183 = vmul.f32 %v182, %v182
    %184 = vadd.xlane.f32.xlu0 %v183
    %v185 = vpop.xlane.xlu0 %184
    %v186 = vmul.f32 %v185, 0.03125
    %v187 = vadd.f32 %v186, 1e-05
    %v188 = vrsqrt.pop %v187
    %v189 = vmul.f32 %v182, %v188
    %v191 = vlaneseq
    %v192 = vshrl.u32 %v191, 7
    %v193 = vsub.s32 0, %v192
    %v194 = vrot.slane %v173, %v193
    %v196 = vmul.f32 %v189, %v194
    %v198 = vlaneseq
    %v199 = vshrl.u32 %v198, 7
    %v200 = vsub.s32 0, %v199
    %v201 = vrot.slane %v174, %v200
    %v203 = vadd.f32 %v196, %v201
    %v204 = vmax.f32 %v203, 0.0
    %v205 = vld [vmem:[#allocation4] sm:$0xff]
    %v206 = vld [vmem:[#allocation4 + $0x8] sm:$0xff]
    %v207 = vld [vmem:[#allocation4 + $0x10] sm:$0xff]
    %v208 = vld [vmem:[#allocation4 + $0x18] sm:$0xff]
    %v209 = vld [vmem:[#allocation4 + $0x20] sm:$0xff]
    %v210 = vld [vmem:[#allocation4 + $0x28] sm:$0xff]
    %v211 = vld [vmem:[#allocation4 + $0x30] sm:$0xff]
    %v212 = vld [vmem:[#allocation4 + $0x38] sm:$0xff]
    %v213 = vld [vmem:[#allocation4 + $0x40] sm:$0xff]
    %v214 = vld [vmem:[#allocation4 + $0x48] sm:$0xff]
    %v215 = vld [vmem:[#allocation4 + $0x50] sm:$0xff]
    %v216 = vld [vmem:[#allocation4 + $0x58] sm:$0xff]
    %v217 = vld [vmem:[#allocation4 + $0x60] sm:$0xff]
    %v218 = vld [vmem:[#allocation4 + $0x68] sm:$0xff]
    %v219 = vld [vmem:[#allocation4 + $0x70] sm:$0xff]
    %v220 = vld [vmem:[#allocation4 + $0x78] sm:$0xff]
    %v221 = vld [vmem:[%s6] sm:$0x1]
    %v223 = vlaneseq
    %v224 = vshrl.u32 %v223, 7
    %v225 = vsub.s32 0, %v224
    %v226 = vrot.slane %v221, %v225
    %228 = vmatprep.subr.mxu0 0.0
    %229 = vmatpush1.msra.mxu0 %v205
    %230 = vmatprep.subr.mxu0 0.0
    %231 = vmatpush1.msra.mxu0 %v206
    %232 = vmatprep.subr.mxu0 0.0
    %233 = vmatpush1.msra.mxu0 %v207
    %234 = vmatprep.subr.mxu0 0.0
    %235 = vmatpush1.msra.mxu0 %v208
    %236 = vmatprep.subr.mxu0 0.0
    %237 = vmatpush1.msra.mxu0 %v209
    %238 = vmatprep.subr.mxu0 0.0
    %239 = vmatpush1.msra.mxu0 %v210
    %240 = vmatprep.subr.mxu0 0.0
    %241 = vmatpush1.msra.mxu0 %v211
    %242 = vmatprep.subr.mxu0 0.0
    %243 = vmatpush1.msra.mxu0 %v212
    %244 = vmatprep.subr.mxu0 0.0
    %245 = vmatpush1.msra.mxu0 %v213
    %246 = vmatprep.subr.mxu0 0.0
    %247 = vmatpush1.msra.mxu0 %v214
    %248 = vmatprep.subr.mxu0 0.0
    %249 = vmatpush1.msra.mxu0 %v215
    %250 = vmatprep.subr.mxu0 0.0
    %251 = vmatpush1.msra.mxu0 %v216
    %252 = vmatprep.subr.mxu0 0.0
    %253 = vmatpush1.msra.mxu0 %v217
    %254 = vmatprep.subr.mxu0 0.0
    %255 = vmatpush1.msra.mxu0 %v218
    %256 = vmatprep.subr.mxu0 0.0
    %257 = vmatpush1.msra.mxu0 %v219
    %258 = vmatprep.subr.mxu0 0.0
    %259 = vmatpush1.msra.mxu0 %v220
    %260 = vmatprep.subr.mxu0 0.0
    %261 = vmatpush1.msra.mxu0 0.0
    %262 = vmatprep.subr.mxu0 0.0
    %263 = vmatpush1.msra.mxu0 0.0
    %264 = vmatprep.subr.mxu0 0.0
    %265 = vmatpush1.msra.mxu0 0.0
    %266 = vmatprep.subr.mxu0 0.0
    %267 = vmatpush1.msra.mxu0 0.0
    %268 = vmatprep.subr.mxu0 0.0
    %269 = vmatpush1.msra.mxu0 0.0
    %270 = vmatprep.subr.mxu0 0.0
    %271 = vmatpush1.msra.mxu0 0.0
    %272 = vmatprep.subr.mxu0 0.0
    %273 = vmatpush1.msra.mxu0 0.0
    %274 = vmatprep.subr.mxu0 0.0
    %275 = vmatpush1.msra.mxu0 0.0
    %276 = vmatprep.subr.mxu0 0.0
    %277 = vmatpush1.msra.mxu0 0.0
    %278 = vmatprep.subr.mxu0 0.0
    %279 = vmatpush1.msra.mxu0 0.0
    %280 = vmatprep.subr.mxu0 0.0
    %281 = vmatpush1.msra.mxu0 0.0
    %282 = vmatprep.subr.mxu0 0.0
    %283 = vmatpush1.msra.mxu0 0.0
    %284 = vmatprep.subr.mxu0 0.0
    %285 = vmatpush1.msra.mxu0 0.0
    %286 = vmatprep.subr.mxu0 0.0
    %287 = vmatpush1.msra.mxu0 0.0
    %288 = vmatprep.subr.mxu0 0.0
    %289 = vmatpush1.msra.mxu0 0.0
    %290 = vmatprep.subr.mxu0 0.0
    %291 = vmatpush1.msra.mxu0 0.0
    %292 = vmatprep.mubr.f32.mxu0 0.0
    %293 = vmatmul.mubr.f32.gmra.mrb[0].mxu0 %v204
    %v294 = vpop.f32.mrb[0].mxu0
    %v295 = vadd.f32 %v226, %v294
    %v296 = vpop.f32.mrb[0].mxu0
    %297 = vdwg.mxu0
    %v298 = vld [vmem:[%s7] sm:$0x1]
    %v299 = vld [vmem:[%s8] sm:$0x1]
    %300 = vadd.xlane.f32.xlu0 %v295
    %v301 = vpop.xlane.xlu0 %300
    %v302 = vmul.f32 %v301, 0.03125
    %v303 = vsub.f32 %v295, %v302
    %v304 = vsel %vm177, %v303, 0.0
    %v305 = vmul.f32 %v304, %v304
    %306 = vadd.xlane.f32.xlu0 %v305
    %v307 = vpop.xlane.xlu0 %306
    %v308 = vmul.f32 %v307, 0.03125
    %v309 = vadd.f32 %v308, 1e-05
    %v310 = vrsqrt.pop %v309
    %v311 = vmul.f32 %v304, %v310
    %v313 = vlaneseq
    %v314 = vshrl.u32 %v313, 7
    %v315 = vsub.s32 0, %v314
    %v316 = vrot.slane %v298, %v315
    %v318 = vmul.f32 %v311, %v316
    %v320 = vlaneseq
    %v321 = vshrl.u32 %v320, 7
    %v322 = vsub.s32 0, %v321
    %v323 = vrot.slane %v299, %v322
    %v325 = vadd.f32 %v318, %v323
    %v326 = vmax.f32 %v325, 0.0
    %v327 = vld [vmem:[#allocation6] sm:$0xff]
    %v328 = vld [vmem:[#allocation6 + $0x8] sm:$0xff]
    %v329 = vld [vmem:[#allocation6 + $0x10] sm:$0xff]
    %v330 = vld [vmem:[#allocation6 + $0x18] sm:$0xff]
    %v331 = vld [vmem:[#allocation6 + $0x20] sm:$0xff]
    %v332 = vld [vmem:[#allocation6 + $0x28] sm:$0xff]
    %v333 = vld [vmem:[#allocation6 + $0x30] sm:$0xff]
    %v334 = vld [vmem:[#allocation6 + $0x38] sm:$0xff]
    %v335 = vld [vmem:[#allocation6 + $0x40] sm:$0xff]
    %v336 = vld [vmem:[#allocation6 + $0x48] sm:$0xff]
    %v337 = vld [vmem:[#allocation6 + $0x50] sm:$0xff]
    %v338 = vld [vmem:[#allocation6 + $0x58] sm:$0xff]
    %v339 = vld [vmem:[#allocation6 + $0x60] sm:$0xff]
    %v340 = vld [vmem:[#allocation6 + $0x68] sm:$0xff]
    %v341 = vld [vmem:[#allocation6 + $0x70] sm:$0xff]
    %v342 = vld [vmem:[#allocation6 + $0x78] sm:$0xff]
    %v343 = vld [vmem:[%s10] sm:$0x1]
    %v345 = vlaneseq
    %v346 = vshrl.u32 %v345, 7
    %v347 = vsub.s32 0, %v346
    %v348 = vrot.slane %v343, %v347
    %350 = vmatprep.subr.mxu0 0.0
    %351 = vmatpush1.msra.mxu0 %v327
    %352 = vmatprep.subr.mxu0 0.0
    %353 = vmatpush1.msra.mxu0 %v328
    %354 = vmatprep.subr.mxu0 0.0
    %355 = vmatpush1.msra.mxu0 %v329
    %356 = vmatprep.subr.mxu0 0.0
    %357 = vmatpush1.msra.mxu0 %v330
    %358 = vmatprep.subr.mxu0 0.0
    %359 = vmatpush1.msra.mxu0 %v331
    %360 = vmatprep.subr.mxu0 0.0
    %361 = vmatpush1.msra.mxu0 %v332
    %362 = vmatprep.subr.mxu0 0.0
    %363 = vmatpush1.msra.mxu0 %v333
    %364 = vmatprep.subr.mxu0 0.0
    %365 = vmatpush1.msra.mxu0 %v334
    %366 = vmatprep.subr.mxu0 0.0
    %367 = vmatpush1.msra.mxu0 %v335
    %368 = vmatprep.subr.mxu0 0.0
    %369 = vmatpush1.msra.mxu0 %v336
    %370 = vmatprep.subr.mxu0 0.0
    %371 = vmatpush1.msra.mxu0 %v337
    %372 = vmatprep.subr.mxu0 0.0
    %373 = vmatpush1.msra.mxu0 %v338
    %374 = vmatprep.subr.mxu0 0.0
    %375 = vmatpush1.msra.mxu0 %v339
    %376 = vmatprep.subr.mxu0 0.0
    %377 = vmatpush1.msra.mxu0 %v340
    %378 = vmatprep.subr.mxu0 0.0
    %379 = vmatpush1.msra.mxu0 %v341
    %380 = vmatprep.subr.mxu0 0.0
    %381 = vmatpush1.msra.mxu0 %v342
    %382 = vmatprep.subr.mxu0 0.0
    %383 = vmatpush1.msra.mxu0 0.0
    %384 = vmatprep.subr.mxu0 0.0
    %385 = vmatpush1.msra.mxu0 0.0
    %386 = vmatprep.subr.mxu0 0.0
    %387 = vmatpush1.msra.mxu0 0.0
    %388 = vmatprep.subr.mxu0 0.0
    %389 = vmatpush1.msra.mxu0 0.0
    %390 = vmatprep.subr.mxu0 0.0
    %391 = vmatpush1.msra.mxu0 0.0
    %392 = vmatprep.subr.mxu0 0.0
    %393 = vmatpush1.msra.mxu0 0.0
    %394 = vmatprep.subr.mxu0 0.0
    %395 = vmatpush1.msra.mxu0 0.0
    %396 = vmatprep.subr.mxu0 0.0
    %397 = vmatpush1.msra.mxu0 0.0
    %398 = vmatprep.subr.mxu0 0.0
    %399 = vmatpush1.msra.mxu0 0.0
    %400 = vmatprep.subr.mxu0 0.0
    %401 = vmatpush1.msra.mxu0 0.0
    %402 = vmatprep.subr.mxu0 0.0
    %403 = vmatpush1.msra.mxu0 0.0
    %404 = vmatprep.subr.mxu0 0.0
    %405 = vmatpush1.msra.mxu0 0.0
    %406 = vmatprep.subr.mxu0 0.0
    %407 = vmatpush1.msra.mxu0 0.0
    %408 = vmatprep.subr.mxu0 0.0
    %409 = vmatpush1.msra.mxu0 0.0
    %410 = vmatprep.subr.mxu0 0.0
    %411 = vmatpush1.msra.mxu0 0.0
    %412 = vmatprep.subr.mxu0 0.0
    %413 = vmatpush1.msra.mxu0 0.0
    %414 = vmatprep.mubr.f32.mxu0 0.0
    %415 = vmatmul.mubr.f32.gmra.mrb[0].mxu0 %v326
    %v416 = vpop.f32.mrb[0].mxu0
    %v417 = vadd.f32 %v348, %v416
    %v418 = vpop.f32.mrb[0].mxu0
    %419 = vdwg.mxu0
    %420 = vst [vmem:[%s11] sm:$0xff] %v417
    // Predicated region
    $region58: #{dqn_forward.1} parent=1 // pred_check
      _
    $region59: #{dqn_forward.1} parent=1 // pred_check_branch
      %422 = sbr.rel (0) target = $region61
    $region60: #{dqn_forward.1} parent=1 // pred_region
      _
    $region61: #{dqn_forward.1} parent=1 // pred_fallthru
      _
    // Predicated region
    $region62: #{dqn_forward.1} parent=1 // pred_check
      _
    $region63: #{dqn_forward.1} parent=1 // pred_check_branch
      %424 = sbr.rel (0) target = $region65
    $region64: #{dqn_forward.1} parent=1 // pred_region
      _
    $region65: #{dqn_forward.1} parent=1 // pred_fallthru
      _
    %425 = vsyncpa [#allocation3], 1
    %426 = vsyncpa [#allocation5], 1

</llo_original>
